<compile_context>
chip_gen: v7x
topology: tpu7x:2x2x1
jax: 0.10.0
libtpu: 0.0.40
codegen_flags: <defaults>
</compile_context>

<pallas_src>
import jax
import jax.numpy as jnp
from jax.experimental import pallas as pl
from jax.experimental.pallas import tpu as pltpu


def _round_up(x: int, m: int) -> int:
    return pl.cdiv(x, m) * m


def _linear_kernel_single_k(x_ref, w_ref, b_ref, o_ref):
    """Whole reduction in one block: o = (x @ w + b), cast to output dtype."""
    o_ref[...] = (
        jnp.dot(x_ref[...], w_ref[...], preferred_element_type=jnp.float32)
        + b_ref[...]
    ).astype(o_ref.dtype)


def _linear_kernel_ktiled(x_ref, w_ref, b_ref, o_ref, acc_ref):
    """K-tiled matmul with an f32 VMEM accumulator.

    Bias is folded into the k==0 init; the accumulator is cast and stored to
    the output block (native dtype) only on the last k step.
    """
    k = pl.program_id(2)

    @pl.when(k == 0)
    def _():
        acc_ref[...] = jnp.broadcast_to(
            b_ref[...].astype(jnp.float32), acc_ref.shape
        )

    acc_ref[...] += jnp.dot(
        x_ref[...], w_ref[...], preferred_element_type=jnp.float32
    )

    @pl.when(k == pl.num_programs(2) - 1)
    def _():
        o_ref[...] = acc_ref[...].astype(o_ref.dtype)


@jax.jit
def snpnet_forward(snps, weight, bias):
    """snps: [B, N_snp], weight: [N_snp, H], bias: [H] -> [B, H]."""
    M, K = snps.shape
    K2, N = weight.shape
    assert K == K2, "weight must be [snp_number, hidden] (transposed vs PyTorch)"
    assert bias.shape == (N,)

    out_dtype = snps.dtype

    # Tile selection, clamped to the (padded) array dims:
    #  - tm: sublane dim of x / out  -> multiple of 8, up to 256
    #  - tn: lane dim of w / b / out -> multiple of 128, up to 512 (lane-dense)
    #  - tk: lane dim of x, sublane dim of w -> multiple of 128, up to 1024
    tm = min(_round_up(M, 8), 256)
    tn = min(_round_up(N, 128), 512)
    tk = min(_round_up(K, 128), 1024)

    Mp = _round_up(M, tm)
    Np = _round_up(N, tn)
    Kp = _round_up(K, tk)

    x, w, b = snps, weight, bias
    # Zero-pad to tile multiples when needed (exact for a matmul reduction).
    if (Mp, Kp) != (M, K):
        x = jnp.pad(x, ((0, Mp - M), (0, Kp - K)))
    if (Kp, Np) != (K, N):
        w = jnp.pad(w, ((0, Kp - K), (0, Np - N)))
    if Np != N:
        b = jnp.pad(b, (0, Np - N))
    b2 = b.reshape(1, Np)  # keep bias 2-D so its tile is (1, tn)

    out_shape = jax.ShapeDtypeStruct((Mp, Np), out_dtype)
    cost = pl.CostEstimate(
        flops=2 * Mp * Np * Kp,
        transcendentals=0,
        bytes_accessed=(Mp * Kp + Kp * Np + Np + Mp * Np) * 4,
    )

    if Kp == tk:
        # snp_number fits in a single K block: 2-D grid, no accumulator.
        grid = (Mp // tm, Np // tn)
        out = pl.pallas_call(
            _linear_kernel_single_k,
            out_shape=out_shape,
            grid_spec=pltpu.PrefetchScalarGridSpec(
                num_scalar_prefetch=0,
                grid=grid,
                in_specs=[
                    pl.BlockSpec((tm, tk), lambda i, j: (i, 0)),  # x row-panel
                    pl.BlockSpec((tk, tn), lambda i, j: (0, j)),  # w col-panel
                    pl.BlockSpec((1, tn), lambda i, j: (0, j)),   # bias tile
                ],
                out_specs=pl.BlockSpec((tm, tn), lambda i, j: (i, j)),
            ),
            compiler_params=pltpu.CompilerParams(
                dimension_semantics=("parallel", "parallel")
            ),
            cost_estimate=cost,
        )(x, w, b2)
    else:
        # Large snp_number: tile the reduction (innermost, "arbitrary" axis),
        # accumulate in an f32 VMEM scratch, store once at the last k step.
        grid = (Mp // tm, Np // tn, Kp // tk)
        out = pl.pallas_call(
            _linear_kernel_ktiled,
            out_shape=out_shape,
            grid_spec=pltpu.PrefetchScalarGridSpec(
                num_scalar_prefetch=0,
                grid=grid,
                in_specs=[
                    pl.BlockSpec((tm, tk), lambda i, j, k: (i, k)),  # x tile
                    pl.BlockSpec((tk, tn), lambda i, j, k: (k, j)),  # w tile
                    pl.BlockSpec((1, tn), lambda i, j, k: (0, j)),   # bias tile
                ],
                out_specs=pl.BlockSpec((tm, tn), lambda i, j, k: (i, j)),
                scratch_shapes=[pltpu.VMEM((tm, tn), jnp.float32)],
            ),
            compiler_params=pltpu.CompilerParams(
                dimension_semantics=("parallel", "parallel", "arbitrary")
            ),
            cost_estimate=cost,
        )(x, w, b2)

    if (Mp, Np) != (M, N):
        out = out[:M, :N]
    return out


def init_snpnet_params(key, snp_number, hidden):
    """Deterministic init mimicking PyTorch nn.Linear (uniform +-1/sqrt(fan_in))."""
    kw, kb = jax.random.split(key)
    bound = 1.0 / (snp_number ** 0.5)
    weight = jax.random.uniform(
        kw, (snp_number, hidden), jnp.float32, minval=-bound, maxval=bound
    )
    bias = jax.random.uniform(
        kb, (hidden,), jnp.float32, minval=-bound, maxval=bound
    )
    return weight, bias


if __name__ == "__main__":
    SNP_NUMBER = 256   # snp_number passed to SNPNet.__init__
    HIDDEN = 128       # output width of SimpleLinear
    BATCH = 8

    key = jax.random.PRNGKey(0)
    k_x, k_p, k_x2, k_p2, k_x3, k_p3 = jax.random.split(key, 6)

    # Aligned shape: single grid step, weight fully resident in VMEM.
    snps = jax.random.normal(k_x, (BATCH, SNP_NUMBER), jnp.float32)
    weight, bias = init_snpnet_params(k_p, SNP_NUMBER, HIDDEN)
    out = jax.block_until_ready(snpnet_forward(snps, weight, bias))
    ref = snps @ weight + bias
    assert out.shape == (BATCH, HIDDEN)
    assert out.dtype == snps.dtype
    assert jnp.allclose(out, ref, atol=1e-5, rtol=1e-5)

    # Non-aligned shape: exercises the zero-padding path (real snp_number
    # values are rarely multiples of 128).
    snps2 = jax.random.normal(k_x2, (7, 250), jnp.float32)
    weight2, bias2 = init_snpnet_params(k_p2, 250, 130)
    out2 = jax.block_until_ready(snpnet_forward(snps2, weight2, bias2))
    ref2 = snps2 @ weight2 + bias2
    assert out2.shape == (7, 130)
    assert jnp.allclose(out2, ref2, atol=1e-5, rtol=1e-5)

    # Large snp_number: exercises the K-tiled accumulator path.
    snps3 = jax.random.normal(k_x3, (16, 3000), jnp.float32)
    weight3, bias3 = init_snpnet_params(k_p3, 3000, 128)
    out3 = jax.block_until_ready(snpnet_forward(snps3, weight3, bias3))
    ref3 = snps3 @ weight3 + bias3
    assert out3.shape == (16, 128)
    assert jnp.allclose(out3, ref3, atol=1e-4, rtol=1e-4)

    print("KERNEL_OK")
</pallas_src>

<mosaic_0001>
module attributes {stable_mosaic.version = 11 : i64} {
  func.func @_linear_kernel_single_k(%arg0: i32, %arg1: i32, %arg2: memref<8x256xf32, #tpu.memory_space<vmem>>, %arg3: memref<256x128xf32, #tpu.memory_space<vmem>>, %arg4: memref<1x128xf32, #tpu.memory_space<vmem>>, %arg5: memref<8x128xf32, #tpu.memory_space<vmem>>) attributes {dimension_semantics = [#tpu.dimension_semantics<parallel>, #tpu.dimension_semantics<parallel>], iteration_bounds = array<i64: 1, 1>, scalar_prefetch = 0 : i64, scratch_operands = 0 : i64, tpu.core_type = #tpu.core_type<tc>, window_params = [{transform_indices = @transform_0, window_bounds = array<i64: 8, 256>}, {transform_indices = @transform_1, window_bounds = array<i64: 256, 128>}, {transform_indices = @transform_2, window_bounds = array<i64: 1, 128>}, {transform_indices = @transform_3, window_bounds = array<i64: 8, 128>}]} {
    %c0 = arith.constant 0 : index
    %c0_0 = arith.constant 0 : index
    %0 = vector.load %arg2[%c0, %c0_0] : memref<8x256xf32, #tpu.memory_space<vmem>>, vector<8x256xf32>
    %c0_1 = arith.constant 0 : index
    %c0_2 = arith.constant 0 : index
    %1 = vector.load %arg3[%c0_1, %c0_2] : memref<256x128xf32, #tpu.memory_space<vmem>>, vector<256x128xf32>
    %cst = arith.constant dense<0.000000e+00> : vector<8x128xf32>
    %2 = tpu.matmul %0, %1, %cst {dimension_numbers = #tpu.dot_dimension_numbers<[1], [0], [0], [1], [0, 0, 1, 1], [], []>} : vector<8x256xf32>, vector<256x128xf32>, vector<8x128xf32> -> vector<8x128xf32>
    %c0_3 = arith.constant 0 : index
    %c0_4 = arith.constant 0 : index
    %3 = vector.load %arg4[%c0_3, %c0_4] : memref<1x128xf32, #tpu.memory_space<vmem>>, vector<1x128xf32>
    %4 = vector.broadcast %3 : vector<1x128xf32> to vector<8x128xf32>
    %5 = arith.addf %2, %4 : vector<8x128xf32>
    %c0_5 = arith.constant 0 : index
    %c0_6 = arith.constant 0 : index
    %6 = vector.load %arg5[%c0_5, %c0_6] : memref<8x128xf32, #tpu.memory_space<vmem>>, vector<8x128xf32>
    tpu.vector_store %arg5[%c0_5, %c0_6], %5 {strides = array<i32>} : memref<8x128xf32, #tpu.memory_space<vmem>>, vector<8x128xf32>,
    return
  }
  func.func @transform_0(%arg0: i32, %arg1: i32) -> (i32, i32) {
    %c0_i32 = arith.constant 0 : i32
    %c0_i32_0 = arith.constant 0 : i32
    return %arg0, %c0_i32 : i32, i32
  }
  func.func @transform_1(%arg0: i32, %arg1: i32) -> (i32, i32) {
    %c0_i32 = arith.constant 0 : i32
    %c0_i32_0 = arith.constant 0 : i32
    return %c0_i32, %arg1 : i32, i32
  }
  func.func @transform_2(%arg0: i32, %arg1: i32) -> (i32, i32) {
    %c0_i32 = arith.constant 0 : i32
    %c0_i32_0 = arith.constant 0 : i32
    return %c0_i32, %arg1 : i32, i32
  }
  func.func @transform_3(%arg0: i32, %arg1: i32) -> (i32, i32) {
    %c0_i32 = arith.constant 0 : i32
    return %arg0, %arg1 : i32, i32
  }
}

</mosaic_0001>

<llo_original>
// kernel: snpnet_forward.1
$region0: #{snpnet_forward.1}
  #allocation0 [shape = 'u32[]', space=smem, size = 0x4, offset = 0x4, fixed_abs, tag = 'smem constant byte address 0x4 - core index']
  #allocation1 [shape = 'u32[144,128]{1,0:T(1,128)}', space=vmem, size = 0x12000, scoped, tag = 'internal scratch']
  %s0 = inlined_call_operand.hbm [shape: f32[8,256], index: 0, kind: input, shape index: {}]
  %s1 = inlined_call_operand.hbm [shape: f32[256,128], index: 1, kind: input, shape index: {}]
  %s2 = inlined_call_operand.vmem [shape: f32[1,128], index: 2, kind: input, shape index: {}]
  %s3 = inlined_call_operand.hbm [shape: f32[8,128], index: 3, kind: output, shape index: {}]
  %s4 = sld [smem:[#allocation0]]
  $region30: #{snpnet_forward.1} parent=0
    _
  %s6 = ssub.s32 1, %s4
  %s7 = scalar_select 0, %s6, %s4
  $region1: #{snpnet_forward.1} parent=0
    #allocation2 [shape = 'u8[8192]{0}', space=vmem, size = 0x2000, scoped, tag = 'input window, operand 0, single buffered']
    #allocation3 [shape = 's32[1]{0}', space=sflag, size = 0x4, scoped, tag = 'scoped memory for snpnet_forward.1']
    #allocation4 [shape = 's32[1]{0}', space=sflag, size = 0x4, scoped, tag = 'scoped memory for snpnet_forward.1']
    #allocation5 [shape = 'u8[131072]{0}', space=vmem, size = 0x20000, scoped, tag = 'input window, operand 1, single buffered']
    #allocation6 [shape = 's32[1]{0}', space=sflag, size = 0x4, scoped, tag = 'scoped memory for snpnet_forward.1']
    #allocation7 [shape = 'u8[4096]{0}', space=vmem, size = 0x1000, scoped, tag = 'output window, operand 0, single buffered']
    %8 = vsyncpa [#allocation3], 0
    %9 = vsyncpa [#allocation6], 0
    %10 = vsyncpa [#allocation4], 0
    // Predicated region
    $region2: #{snpnet_forward.1} parent=1 // pred_check
      _
    $region3: #{snpnet_forward.1} parent=1 // pred_check_branch
      %12 = sbr.rel (0) target = $region5
    $region4: #{snpnet_forward.1} parent=1 // pred_region
      %s14 = ssub.s32 256, 256
      %15 = vsyncadd [#allocation3], %s14
      %s17 = sshll.u32 [#allocation2], 4
      %s18 = int_to_ptr.vmem [resolvable:$true] %s17
      %20 = dma.hbm_to_vmem [thread:$0]  %s0, 256, %s18, [#allocation3]
    $region5: #{snpnet_forward.1} parent=1 // pred_fallthru
      _
    // Predicated region
    $region6: #{snpnet_forward.1} parent=1 // pred_check
      _
    $region7: #{snpnet_forward.1} parent=1 // pred_check_branch
      %22 = sbr.rel (0) target = $region9
    $region8: #{snpnet_forward.1} parent=1 // pred_region
      %s24 = ssub.s32 4096, 4096
      %25 = vsyncadd [#allocation6], %s24
      %s26 = sshll.u32 [#allocation5], 4
      %s27 = int_to_ptr.vmem [resolvable:$true] %s26
      %32 = dma.hbm_to_vmem [thread:$0]  %s1, 4096, %s27, [#allocation6], 128, 128, 8
    $region9: #{snpnet_forward.1} parent=1 // pred_fallthru
      _
    // Predicated region
    $region10: #{snpnet_forward.1} parent=1 // pred_check
      _
    $region11: #{snpnet_forward.1} parent=1 // pred_check_branch
      %34 = sbr.rel (0) target = $region13
    $region12: #{snpnet_forward.1} parent=1 // pred_region
      _
    $region13: #{snpnet_forward.1} parent=1 // pred_fallthru
      _
    // Predicated region
    $region14: #{snpnet_forward.1} parent=1 // pred_check
      _
    $region15: #{snpnet_forward.1} parent=1 // pred_check_branch
      %36 = sbr.rel (0) target = $region17
    $region16: #{snpnet_forward.1} parent=1 // pred_region
      %37 = dma.done [#allocation3], 256
    $region17: #{snpnet_forward.1} parent=1 // pred_fallthru
      _
    // Predicated region
    $region18: #{snpnet_forward.1} parent=1 // pred_check
      _
    $region19: #{snpnet_forward.1} parent=1 // pred_check_branch
      %39 = sbr.rel (0) target = $region21
    $region20: #{snpnet_forward.1} parent=1 // pred_region
      %40 = dma.done [#allocation6], 4096
    $region21: #{snpnet_forward.1} parent=1 // pred_fallthru
      _
    %v41 = vld [vmem:[#allocation2] sm:$0xff]
    %v42 = vld [vmem:[#allocation2 + $0x8] sm:$0xff]
    %v43 = vld [vmem:[#allocation5] sm:$0xff]
    %v44 = vld [vmem:[#allocation5 + $0x8] sm:$0xff]
    %v45 = vld [vmem:[#allocation5 + $0x10] sm:$0xff]
    %v46 = vld [vmem:[#allocation5 + $0x18] sm:$0xff]
    %v47 = vld [vmem:[#allocation5 + $0x20] sm:$0xff]
    %v48 = vld [vmem:[#allocation5 + $0x28] sm:$0xff]
    %v49 = vld [vmem:[#allocation5 + $0x30] sm:$0xff]
    %v50 = vld [vmem:[#allocation5 + $0x38] sm:$0xff]
    %v51 = vld [vmem:[#allocation5 + $0x40] sm:$0xff]
    %v52 = vld [vmem:[#allocation5 + $0x48] sm:$0xff]
    %v53 = vld [vmem:[#allocation5 + $0x50] sm:$0xff]
    %v54 = vld [vmem:[#allocation5 + $0x58] sm:$0xff]
    %v55 = vld [vmem:[#allocation5 + $0x60] sm:$0xff]
    %v56 = vld [vmem:[#allocation5 + $0x68] sm:$0xff]
    %v57 = vld [vmem:[#allocation5 + $0x70] sm:$0xff]
    %v58 = vld [vmem:[#allocation5 + $0x78] sm:$0xff]
    %v59 = vld [vmem:[#allocation5 + $0x80] sm:$0xff]
    %v60 = vld [vmem:[#allocation5 + $0x88] sm:$0xff]
    %v61 = vld [vmem:[#allocation5 + $0x90] sm:$0xff]
    %v62 = vld [vmem:[#allocation5 + $0x98] sm:$0xff]
    %v63 = vld [vmem:[#allocation5 + $0xa0] sm:$0xff]
    %v64 = vld [vmem:[#allocation5 + $0xa8] sm:$0xff]
    %v65 = vld [vmem:[#allocation5 + $0xb0] sm:$0xff]
    %v66 = vld [vmem:[#allocation5 + $0xb8] sm:$0xff]
    %v67 = vld [vmem:[#allocation5 + $0xc0] sm:$0xff]
    %v68 = vld [vmem:[#allocation5 + $0xc8] sm:$0xff]
    %v69 = vld [vmem:[#allocation5 + $0xd0] sm:$0xff]
    %v70 = vld [vmem:[#allocation5 + $0xd8] sm:$0xff]
    %v71 = vld [vmem:[#allocation5 + $0xe0] sm:$0xff]
    %v72 = vld [vmem:[#allocation5 + $0xe8] sm:$0xff]
    %v73 = vld [vmem:[#allocation5 + $0xf0] sm:$0xff]
    %v74 = vld [vmem:[#allocation5 + $0xf8] sm:$0xff]
    %v75 = vld [vmem:[%s2] sm:$0x1]
    %v77 = vlaneseq
    %v78 = vshrl.u32 %v77, 7
    %v79 = vsub.s32 0, %v78
    %v80 = vrot.slane %v75, %v79
    %82 = vmatprep.subr.mxu0 0.0
    %83 = vmatpush1.msra.mxu0 %v43
    %84 = vmatprep.subr.mxu0 0.0
    %85 = vmatpush1.msra.mxu0 %v44
    %86 = vmatprep.subr.mxu0 0.0
    %87 = vmatpush1.msra.mxu0 %v45
    %88 = vmatprep.subr.mxu0 0.0
    %89 = vmatpush1.msra.mxu0 %v46
    %90 = vmatprep.subr.mxu0 0.0
    %91 = vmatpush1.msra.mxu0 %v47
    %92 = vmatprep.subr.mxu0 0.0
    %93 = vmatpush1.msra.mxu0 %v48
    %94 = vmatprep.subr.mxu0 0.0
    %95 = vmatpush1.msra.mxu0 %v49
    %96 = vmatprep.subr.mxu0 0.0
    %97 = vmatpush1.msra.mxu0 %v50
    %98 = vmatprep.subr.mxu0 0.0
    %99 = vmatpush1.msra.mxu0 %v51
    %100 = vmatprep.subr.mxu0 0.0
    %101 = vmatpush1.msra.mxu0 %v52
    %102 = vmatprep.subr.mxu0 0.0
    %103 = vmatpush1.msra.mxu0 %v53
    %104 = vmatprep.subr.mxu0 0.0
    %105 = vmatpush1.msra.mxu0 %v54
    %106 = vmatprep.subr.mxu0 0.0
    %107 = vmatpush1.msra.mxu0 %v55
    %108 = vmatprep.subr.mxu0 0.0
    %109 = vmatpush1.msra.mxu0 %v56
    %110 = vmatprep.subr.mxu0 0.0
    %111 = vmatpush1.msra.mxu0 %v57
    %112 = vmatprep.subr.mxu0 0.0
    %113 = vmatpush1.msra.mxu0 %v58
    %114 = vmatprep.subr.mxu0 0.0
    %115 = vmatpush1.msra.mxu0 %v59
    %116 = vmatprep.subr.mxu0 0.0
    %117 = vmatpush1.msra.mxu0 %v60
    %118 = vmatprep.subr.mxu0 0.0
    %119 = vmatpush1.msra.mxu0 %v61
    %120 = vmatprep.subr.mxu0 0.0
    %121 = vmatpush1.msra.mxu0 %v62
    %122 = vmatprep.subr.mxu0 0.0
    %123 = vmatpush1.msra.mxu0 %v63
    %124 = vmatprep.subr.mxu0 0.0
    %125 = vmatpush1.msra.mxu0 %v64
    %126 = vmatprep.subr.mxu0 0.0
    %127 = vmatpush1.msra.mxu0 %v65
    %128 = vmatprep.subr.mxu0 0.0
    %129 = vmatpush1.msra.mxu0 %v66
    %130 = vmatprep.subr.mxu0 0.0
    %131 = vmatpush1.msra.mxu0 %v67
    %132 = vmatprep.subr.mxu0 0.0
    %133 = vmatpush1.msra.mxu0 %v68
    %134 = vmatprep.subr.mxu0 0.0
    %135 = vmatpush1.msra.mxu0 %v69
    %136 = vmatprep.subr.mxu0 0.0
    %137 = vmatpush1.msra.mxu0 %v70
    %138 = vmatprep.subr.mxu0 0.0
    %139 = vmatpush1.msra.mxu0 %v71
    %140 = vmatprep.subr.mxu0 0.0
    %141 = vmatpush1.msra.mxu0 %v72
    %142 = vmatprep.subr.mxu0 0.0
    %143 = vmatpush1.msra.mxu0 %v73
    %144 = vmatprep.subr.mxu0 0.0
    %145 = vmatpush1.msra.mxu0 %v74
    %146 = vmatprep.mubr.f32.mxu0 %v42
    %147 = vmatmul.mubr.f32.gmra.mrb[0].mxu0 %v41
    %v148 = vpop.f32.mrb[0].mxu0
    %v149 = vadd.f32 %v80, %v148
    %v150 = vpop.f32.mrb[0].mxu0
    %151 = vdwg.mxu0
    %152 = vst [vmem:[#allocation7] sm:$0xff] %v149
    // Predicated region
    $region22: #{snpnet_forward.1} parent=1 // pred_check
      _
    $region23: #{snpnet_forward.1} parent=1 // pred_check_branch
      %154 = sbr.rel (0) target = $region25
    $region24: #{snpnet_forward.1} parent=1 // pred_region
      %s156 = ssub.s32 128, 128
      %157 = vsyncadd [#allocation4], %s156
      %s159 = sshll.u32 [#allocation7], 4
      %s160 = int_to_ptr.vmem [resolvable:$true] %s159
      %162 = dma.vmem_to_hbm [thread:$0]  %s160, 128, %s3, [#allocation4]
    $region25: #{snpnet_forward.1} parent=1 // pred_fallthru
      _
    // Predicated region
    $region26: #{snpnet_forward.1} parent=1 // pred_check
      _
    $region27: #{snpnet_forward.1} parent=1 // pred_check_branch
      %164 = sbr.rel (0) target = $region29
    $region28: #{snpnet_forward.1} parent=1 // pred_region
      %165 = dma.done [#allocation4], 128
    $region29: #{snpnet_forward.1} parent=1 // pred_fallthru
      _
    %166 = vsyncpa [#allocation3], 1
    %167 = vsyncpa [#allocation6], 1
    %168 = vsyncpa [#allocation4], 1

</llo_original>
